<compile_context>
chip_gen: v7x
topology: tpu7x:2x2x1
jax: 0.10.0
libtpu: 0.0.40
codegen_flags: <defaults>
</compile_context>

<pallas_src>
import functools

import jax
import jax.numpy as jnp
from jax.experimental import pallas as pl
from jax.experimental.pallas import tpu as pltpu


# Packed-parameter layout (float32, shape (32, 16)), weights stored [out, in],
# each layer's sub-block starts at an 8-row-aligned offset:
#   rows  0:10, cols 0:6   -> W1 [10, 6]   rows  0:10, col  6 -> b1 [10]
#   rows 16:21, cols 0:10  -> W2 [5, 10]   rows 16:21, col 10 -> b2 [5]
#   rows 24:28, cols 0:5   -> W3 [4, 5]    rows 24:28, col  5 -> b3 [4]
_P_ROWS, _P_COLS = 32, 16


def _mlp_kernel(p_ref, x_ref, o_ref, *, mxu_dtype):
    # x tile is feature-major: [6, TB]; storage dtype may be bf16 or f32.
    x = x_ref[...]
    p = p_ref[...]

    w1, b1 = p[0:10, 0:6], p[0:10, 6:7]
    w2, b2 = p[16:21, 0:10], p[16:21, 10:11]
    w3, b3 = p[24:28, 0:5], p[24:28, 5:6]

    def mm(w, h):
        # Operands in mxu_dtype (f32 for accuracy, bf16 to cut MXU passes);
        # accumulation stays f32 via preferred_element_type on every chip.
        return jnp.dot(w.astype(mxu_dtype), h.astype(mxu_dtype),
                       preferred_element_type=jnp.float32)

    # fc1 + relu, fc2 + relu, fc3   (all feature-major: W @ x + b)
    h1 = jnp.maximum(mm(w1, x) + b1, 0.0)
    h2 = jnp.maximum(mm(w2, h1) + b2, 0.0)
    logits = mm(w3, h2) + b3                      # [4, TB], f32

    # Softmax over the feature axis (axis 0 in feature-major layout).
    m = jnp.max(logits, axis=0, keepdims=True)
    e = jnp.exp(logits - m)
    denom = jnp.sum(e, axis=0, keepdims=True)
    inv = pl.reciprocal(denom, approx=False)      # exact EUP reciprocal
    o_ref[...] = (e * inv).astype(o_ref.dtype)


def pack_params(params):
    """(w1,b1,w2,b2,w3,b3) with w:[out,in], b:[out] -> one (32,16) f32 buffer
    with 8-row-aligned sub-blocks (see layout comment above)."""
    w1, b1, w2, b2, w3, b3 = params
    p = jnp.zeros((_P_ROWS, _P_COLS), jnp.float32)
    p = p.at[0:10, 0:6].set(w1).at[0:10, 6].set(b1)
    p = p.at[16:21, 0:10].set(w2).at[16:21, 10].set(b2)
    p = p.at[24:28, 0:5].set(w3).at[24:28, 5].set(b3)
    return p


def _round_up(v, m):
    return pl.cdiv(v, m) * m


def _choose_tb(batch, tb_max, min_steps):
    """Batch tile: multiple of 128, at least `min_steps` grid steps when the
    batch allows it, capped at tb_max (VMEM budget, esp. v5e's 16 MiB scoped
    default / v7x's 64 MiB physical). Bounds padding waste to ~B/min_steps."""
    b128 = _round_up(batch, 128)
    tb = _round_up(pl.cdiv(b128, min_steps), 128)
    return max(128, min(tb, tb_max))


@functools.partial(
    jax.jit, static_argnames=("tb_max", "min_steps", "mxu_dtype", "out_dtype"))
def linear_net_forward_fm(x_fm, packed_params, *, tb_max=32768, min_steps=4,
                          mxu_dtype=jnp.float32, out_dtype=jnp.float32):
    """Feature-major entry: x_fm [6, B] -> [4, B] softmax probabilities.
    No wrapper transposes; only a zero-pad when B is not a TB multiple."""
    F, B = x_fm.shape
    assert F == 6, f"expected 6 input features, got {F}"

    TB = _choose_tb(B, tb_max, min_steps)
    Bp = _round_up(B, TB)
    if Bp != B:
        # Padded columns are zeros; softmax of a zero column is finite, and
        # the columns are sliced off below, so nothing leaks.
        x_fm = jnp.pad(x_fm, ((0, 0), (0, Bp - B)))

    grid = (Bp // TB,)
    kernel = functools.partial(_mlp_kernel, mxu_dtype=mxu_dtype)

    out_fm = pl.pallas_call(
        kernel,
        out_shape=jax.ShapeDtypeStruct((4, Bp), out_dtype),
        grid=grid,
        in_specs=[
            # Packed params: constant index_map -> DMA'd once, VMEM-resident.
            pl.BlockSpec((_P_ROWS, _P_COLS), lambda i: (0, 0)),
            # x: feature-major batch tiles, lane-dense along the batch axis.
            pl.BlockSpec((6, TB), lambda i: (0, i)),
        ],
        # Lane-dense [4, TB] output slab (full-lane stores, no masked vst).
        out_specs=pl.BlockSpec((4, TB), lambda i: (0, i)),
        compiler_params=pltpu.CompilerParams(
            # Shard batch tiles across TensorCores (v7x megacore).
            dimension_semantics=("parallel",),
            # Explicit scoped-VMEM budget: double-buffered x/out tiles plus
            # in-kernel intermediates (~0.2 KiB per lane) fit at TB=32768 on
            # every generation (v5e default is only 16 MiB; v7x physical 64).
            vmem_limit_bytes=48 * 1024 * 1024,
        ),
    )(packed_params, x_fm)

    return out_fm[:, :B] if Bp != B else out_fm


@functools.partial(
    jax.jit,
    static_argnames=("storage_dtype", "tb_max", "min_steps", "mxu_dtype"))
def linear_net_forward(x, packed_params, *, storage_dtype=jnp.bfloat16,
                       tb_max=32768, min_steps=4, mxu_dtype=jnp.float32):
    """PyTorch-equivalent API: x [B, 6] -> [B, 4] float32 softmax probs.
    This convenience path pays one XLA transpose each way; bandwidth-critical
    callers should use linear_net_forward_fm with feature-major data."""
    B, F = x.shape
    assert F == 6, f"expected 6 input features, got {F}"
    x_fm = x.astype(storage_dtype).T          # downcast fused with transpose
    out_fm = linear_net_forward_fm(x_fm, packed_params, tb_max=tb_max,
                                   min_steps=min_steps, mxu_dtype=mxu_dtype)
    return out_fm.T


def init_params(key):
    """PyTorch nn.Linear default init: U(-1/sqrt(fan_in), 1/sqrt(fan_in)).
    Weights stored [out, in] (PyTorch layout), biases [out]."""
    def linear(key, fan_in, fan_out):
        kw, kb = jax.random.split(key)
        bound = 1.0 / (fan_in ** 0.5)
        w = jax.random.uniform(kw, (fan_out, fan_in), jnp.float32, -bound, bound)
        b = jax.random.uniform(kb, (fan_out,), jnp.float32, -bound, bound)
        return w, b

    k1, k2, k3 = jax.random.split(key, 3)
    w1, b1 = linear(k1, 6, 10)
    w2, b2 = linear(k2, 10, 5)
    w3, b3 = linear(k3, 5, 4)
    return (w1, b1, w2, b2, w3, b3)


def _reference(x, params):
    w1, b1, w2, b2, w3, b3 = params
    h = jnp.maximum(x @ w1.T + b1, 0.0)
    h = jnp.maximum(h @ w2.T + b2, 0.0)
    return jax.nn.softmax(h @ w3.T + b3, axis=1)


if __name__ == "__main__":
    key = jax.random.PRNGKey(0)
    k_params, k_x1, k_x2 = jax.random.split(key, 3)

    params = init_params(k_params)
    packed = pack_params(params)

    # Small batch, single tile, f32 storage + f32 MXU operands.
    x = jax.random.normal(k_x1, (8, 6), jnp.float32)
    out = jax.block_until_ready(
        linear_net_forward(x, packed, storage_dtype=jnp.float32))
    ref = _reference(x, params)
    assert out.shape == (8, 4)
    assert jnp.allclose(out, ref, atol=2e-3), "f32 mismatch vs JAX reference"
    assert jnp.allclose(jnp.sum(out, axis=1), 1.0, atol=1e-4)

    # Batch spanning multiple grid steps (exercises tiling + tail padding),
    # default bf16 x storage (compute stays f32 inside the kernel).
    x2 = jax.random.normal(k_x2, (300, 6), jnp.float32)
    out2 = jax.block_until_ready(linear_net_forward(x2, packed))
    ref2 = _reference(x2, params)
    assert out2.shape == (300, 4)
    assert jnp.allclose(out2, ref2, atol=5e-2), "bf16-storage mismatch"
    assert jnp.allclose(jnp.sum(out2, axis=1), 1.0, atol=1e-4)

    # Feature-major entry (no wrapper transposes) + bf16 MXU operands.
    x2_fm = x2.astype(jnp.bfloat16).T
    out_fm = jax.block_until_ready(
        linear_net_forward_fm(x2_fm, packed, mxu_dtype=jnp.bfloat16))
    assert out_fm.shape == (4, 300)
    assert jnp.allclose(out_fm.T, ref2, atol=5e-2), "feature-major bf16 mismatch"

    print("KERNEL_OK")
</pallas_src>

<mosaic_0001>
module attributes {stable_mosaic.version = 11 : i64} {
  func.func @_mlp_kernel(%arg0: i32, %arg1: memref<32x16xf32, #tpu.memory_space<vmem>>, %arg2: memref<6x128xf32, #tpu.memory_space<vmem>>, %arg3: memref<4x128xf32, #tpu.memory_space<vmem>>) attributes {dimension_semantics = [#tpu.dimension_semantics<parallel>], iteration_bounds = array<i64: 1>, scalar_prefetch = 0 : i64, scratch_operands = 0 : i64, tpu.core_type = #tpu.core_type<tc>, window_params = [{pipeline_mode = #tpu.pipeline_mode<synchronous>, transform_indices = @transform_0, window_bounds = array<i64: 32, 16>}, {transform_indices = @transform_1, window_bounds = array<i64: 6, 128>}, {transform_indices = @transform_2, window_bounds = array<i64: 4, 128>}]} {
    %c0 = arith.constant 0 : index
    %c0_0 = arith.constant 0 : index
    %0 = vector.load %arg2[%c0, %c0_0] : memref<6x128xf32, #tpu.memory_space<vmem>>, vector<6x128xf32>
    %c0_1 = arith.constant 0 : index
    %c0_2 = arith.constant 0 : index
    %1 = vector.load %arg1[%c0_1, %c0_2] : memref<32x16xf32, #tpu.memory_space<vmem>>, vector<32x16xf32>
    %2 = vector.extract_strided_slice %1 {offsets = [0, 0], sizes = [10, 6], strides = [1, 1]} : vector<32x16xf32> to vector<10x6xf32>
    %3 = vector.extract_strided_slice %1 {offsets = [0, 6], sizes = [10, 1], strides = [1, 1]} : vector<32x16xf32> to vector<10x1xf32>
    %4 = vector.extract_strided_slice %1 {offsets = [16, 0], sizes = [5, 10], strides = [1, 1]} : vector<32x16xf32> to vector<5x10xf32>
    %5 = vector.extract_strided_slice %1 {offsets = [16, 10], sizes = [5, 1], strides = [1, 1]} : vector<32x16xf32> to vector<5x1xf32>
    %6 = vector.extract_strided_slice %1 {offsets = [24, 0], sizes = [4, 5], strides = [1, 1]} : vector<32x16xf32> to vector<4x5xf32>
    %7 = vector.extract_strided_slice %1 {offsets = [24, 5], sizes = [4, 1], strides = [1, 1]} : vector<32x16xf32> to vector<4x1xf32>
    %cst = arith.constant dense<0.000000e+00> : vector<10x128xf32>
    %8 = tpu.matmul %2, %0, %cst {dimension_numbers = #tpu.dot_dimension_numbers<[1], [0], [0], [1], [0, 0, 1, 1], [], []>} : vector<10x6xf32>, vector<6x128xf32>, vector<10x128xf32> -> vector<10x128xf32>
    %9 = vector.broadcast %3 : vector<10x1xf32> to vector<10x128xf32>
    %10 = arith.addf %8, %9 : vector<10x128xf32>
    %cst_3 = arith.constant 0.000000e+00 : f32
    %11 = vector.broadcast %cst_3 : f32 to vector<10x128xf32>
    %12 = arith.maximumf %10, %11 : vector<10x128xf32>
    %cst_4 = arith.constant dense<0.000000e+00> : vector<5x128xf32>
    %13 = tpu.matmul %4, %12, %cst_4 {dimension_numbers = #tpu.dot_dimension_numbers<[1], [0], [0], [1], [0, 0, 1, 1], [], []>} : vector<5x10xf32>, vector<10x128xf32>, vector<5x128xf32> -> vector<5x128xf32>
    %14 = vector.broadcast %5 : vector<5x1xf32> to vector<5x128xf32>
    %15 = arith.addf %13, %14 : vector<5x128xf32>
    %cst_5 = arith.constant 0.000000e+00 : f32
    %16 = vector.broadcast %cst_5 : f32 to vector<5x128xf32>
    %17 = arith.maximumf %15, %16 : vector<5x128xf32>
    %cst_6 = arith.constant dense<0.000000e+00> : vector<4x128xf32>
    %18 = tpu.matmul %6, %17, %cst_6 {dimension_numbers = #tpu.dot_dimension_numbers<[1], [0], [0], [1], [0, 0, 1, 1], [], []>} : vector<4x5xf32>, vector<5x128xf32>, vector<4x128xf32> -> vector<4x128xf32>
    %19 = vector.broadcast %7 : vector<4x1xf32> to vector<4x128xf32>
    %20 = arith.addf %18, %19 : vector<4x128xf32>
    %cst_7 = arith.constant dense<0xFF800000> : vector<128xf32>
    %21 = vector.multi_reduction <maximumf>, %20, %cst_7 [0] : vector<4x128xf32> to vector<128xf32>
    %22 = vector.shape_cast %21 : vector<128xf32> to vector<1x128xf32>
    %23 = vector.broadcast %22 : vector<1x128xf32> to vector<4x128xf32>
    %24 = arith.subf %20, %23 : vector<4x128xf32>
    %25 = math.exp %24 : vector<4x128xf32>
    %cst_8 = arith.constant dense<0.000000e+00> : vector<128xf32>
    %26 = vector.multi_reduction <add>, %25, %cst_8 [0] : vector<4x128xf32> to vector<128xf32>
    %27 = vector.shape_cast %26 : vector<128xf32> to vector<1x128xf32>
    %28 = tpu.reciprocal %27 : vector<1x128xf32> -> vector<1x128xf32>
    %29 = vector.broadcast %28 : vector<1x128xf32> to vector<4x128xf32>
    %30 = arith.mulf %25, %29 : vector<4x128xf32>
    %c0_9 = arith.constant 0 : index
    %c0_10 = arith.constant 0 : index
    %31 = vector.load %arg3[%c0_9, %c0_10] : memref<4x128xf32, #tpu.memory_space<vmem>>, vector<4x128xf32>
    tpu.vector_store %arg3[%c0_9, %c0_10], %30 {strides = array<i32>} : memref<4x128xf32, #tpu.memory_space<vmem>>, vector<4x128xf32>,
    return
  }
  func.func @transform_0(%arg0: i32) -> (i32, i32) {
    %c0_i32 = arith.constant 0 : i32
    %c0_i32_0 = arith.constant 0 : i32
    %c0_i32_1 = arith.constant 0 : i32
    return %c0_i32, %c0_i32_0 : i32, i32
  }
  func.func @transform_1(%arg0: i32) -> (i32, i32) {
    %c0_i32 = arith.constant 0 : i32
    %c0_i32_0 = arith.constant 0 : i32
    return %c0_i32, %arg0 : i32, i32
  }
  func.func @transform_2(%arg0: i32) -> (i32, i32) {
    %c0_i32 = arith.constant 0 : i32
    %c0_i32_0 = arith.constant 0 : i32
    return %c0_i32, %arg0 : i32, i32
  }
}

</mosaic_0001>

<llo_original>
// kernel: linear_net_forward_fm.1
$region0: #{linear_net_forward_fm.1}
  #allocation0 [shape = 'u32[]', space=smem, size = 0x4, offset = 0x4, fixed_abs, tag = 'smem constant byte address 0x4 - core index']
  #allocation1 [shape = 'u32[144,128]{1,0:T(1,128)}', space=vmem, size = 0x12000, scoped, tag = 'internal scratch']
  %s0 = inlined_call_operand.vmem [shape: f32[32,16], index: 0, kind: input, shape index: {}]
  %s1 = inlined_call_operand.vmem [shape: f32[6,128], index: 1, kind: input, shape index: {}]
  %s2 = inlined_call_operand.hbm [shape: f32[4,128], index: 2, kind: output, shape index: {}]
  %s3 = sld [smem:[#allocation0]]
  $region18: #{linear_net_forward_fm.1} parent=0
    _
  %s5 = ssub.s32 1, %s3
  %s6 = scalar_select 0, %s5, %s3
  $region1: #{linear_net_forward_fm.1} parent=0
    #allocation2 [shape = 'u8[2048]{0}', space=vmem, size = 0x800, scoped, tag = 'output window, operand 0, single buffered']
    #allocation3 [shape = 's32[1]{0}', space=sflag, size = 0x4, scoped, tag = 'scoped memory for linear_net_forward_fm.1']
    %7 = vsyncpa [#allocation3], 0
    // Predicated region
    $region2: #{linear_net_forward_fm.1} parent=1 // pred_check
      _
    $region3: #{linear_net_forward_fm.1} parent=1 // pred_check_branch
      %9 = sbr.rel (0) target = $region5
    $region4: #{linear_net_forward_fm.1} parent=1 // pred_region
      _
    $region5: #{linear_net_forward_fm.1} parent=1 // pred_fallthru
      _
    // Predicated region
    $region6: #{linear_net_forward_fm.1} parent=1 // pred_check
      _
    $region7: #{linear_net_forward_fm.1} parent=1 // pred_check_branch
      %11 = sbr.rel (0) target = $region9
    $region8: #{linear_net_forward_fm.1} parent=1 // pred_region
      _
    $region9: #{linear_net_forward_fm.1} parent=1 // pred_fallthru
      _
    %v12 = vld [vmem:[%s1] sm:$0x3f]
    %v13 = vld [vmem:[%s0] sm:$0xff]
    %v14 = vld [vmem:[%s0 + $0x8] sm:$0xff]
    %v15 = vld [vmem:[%s0 + $0x10] sm:$0xff]
    %v16 = vld [vmem:[%s0 + $0x18] sm:$0xff]
    %18 = vset.pattern.permute.xlu0 6
    %19 = vperm.xlu0 %18, %v13
    %v20 = vpop.permute.xlu0 %19
    %23 = vset.pattern.permute.xlu0 6
    %24 = vperm.xlu0 %23, %v14
    %v25 = vpop.permute.xlu0 %24
    %vm27 = vcmask 48128
    %v28 = vsel %vm27, %v13, 0
    %v30 = vsel %vm27, %v14, 0
    %vm32 = vcmask 1045504
    %v34 = vsel %vm32, %v12, 0
    %36 = vmatprep.subr.mxu0 0.0
    %37 = vmatpush1.msra.mxu0 %v34
    %38 = vmatprep.subr.mxu0 0.0
    %39 = vmatpush1.msra.mxu0 0.0
    %40 = vmatprep.subr.mxu0 0.0
    %41 = vmatpush1.msra.mxu0 0.0
    %42 = vmatprep.subr.mxu0 0.0
    %43 = vmatpush1.msra.mxu0 0.0
    %44 = vmatprep.subr.mxu0 0.0
    %45 = vmatpush1.msra.mxu0 0.0
    %46 = vmatprep.subr.mxu0 0.0
    %47 = vmatpush1.msra.mxu0 0.0
    %48 = vmatprep.subr.mxu0 0.0
    %49 = vmatpush1.msra.mxu0 0.0
    %50 = vmatprep.subr.mxu0 0.0
    %51 = vmatpush1.msra.mxu0 0.0
    %52 = vmatprep.subr.mxu0 0.0
    %53 = vmatpush1.msra.mxu0 0.0
    %54 = vmatprep.subr.mxu0 0.0
    %55 = vmatpush1.msra.mxu0 0.0
    %56 = vmatprep.subr.mxu0 0.0
    %57 = vmatpush1.msra.mxu0 0.0
    %58 = vmatprep.subr.mxu0 0.0
    %59 = vmatpush1.msra.mxu0 0.0
    %60 = vmatprep.subr.mxu0 0.0
    %61 = vmatpush1.msra.mxu0 0.0
    %62 = vmatprep.subr.mxu0 0.0
    %63 = vmatpush1.msra.mxu0 0.0
    %64 = vmatprep.subr.mxu0 0.0
    %65 = vmatpush1.msra.mxu0 0.0
    %66 = vmatprep.subr.mxu0 0.0
    %67 = vmatpush1.msra.mxu0 0.0
    %68 = vmatprep.subr.mxu0 0.0
    %69 = vmatpush1.msra.mxu0 0.0
    %70 = vmatprep.subr.mxu0 0.0
    %71 = vmatpush1.msra.mxu0 0.0
    %72 = vmatprep.subr.mxu0 0.0
    %73 = vmatpush1.msra.mxu0 0.0
    %74 = vmatprep.subr.mxu0 0.0
    %75 = vmatpush1.msra.mxu0 0.0
    %76 = vmatprep.subr.mxu0 0.0
    %77 = vmatpush1.msra.mxu0 0.0
    %78 = vmatprep.subr.mxu0 0.0
    %79 = vmatpush1.msra.mxu0 0.0
    %80 = vmatprep.subr.mxu0 0.0
    %81 = vmatpush1.msra.mxu0 0.0
    %82 = vmatprep.subr.mxu0 0.0
    %83 = vmatpush1.msra.mxu0 0.0
    %84 = vmatprep.subr.mxu0 0.0
    %85 = vmatpush1.msra.mxu0 0.0
    %86 = vmatprep.subr.mxu0 0.0
    %87 = vmatpush1.msra.mxu0 0.0
    %88 = vmatprep.subr.mxu0 0.0
    %89 = vmatpush1.msra.mxu0 0.0
    %90 = vmatprep.subr.mxu0 0.0
    %91 = vmatpush1.msra.mxu0 0.0
    %92 = vmatprep.subr.mxu0 0.0
    %93 = vmatpush1.msra.mxu0 0.0
    %94 = vmatprep.subr.mxu0 0.0
    %95 = vmatpush1.msra.mxu0 0.0
    %96 = vmatprep.subr.mxu0 0.0
    %97 = vmatpush1.msra.mxu0 0.0
    %98 = vmatprep.subr.mxu0 0.0
    %99 = vmatpush1.msra.mxu0 0.0
    %100 = vmatprep.mubr.f32.mxu0 0.0
    %101 = vmatmul.mubr.f32.gmra.mrb[0].mxu0 %v28
    %v102 = vpop.f32.mrb[0].mxu0
    %v103 = vadd.f32 %v20, %v102
    %v104 = vpop.f32.mrb[0].mxu0
    %105 = vmatprep.mubr.f32.mxu0 0.0
    %106 = vmatmul.mubr.f32.gmra.mrb[0].mxu0 %v30
    %v107 = vpop.f32.mrb[0].mxu0
    %v108 = vadd.f32 %v25, %v107
    %v109 = vpop.f32.mrb[0].mxu0
    %110 = vdwg.mxu0
    %v111 = vmax.f32 %v103, 0.0
    %v112 = vmax.f32 %v108, 0.0
    %114 = vset.pattern.permute.xlu0 10
    %115 = vperm.xlu0 %114, %v15
    %v116 = vpop.permute.xlu0 %115
    %vm118 = vcmask 80896
    %v119 = vsel %vm118, %v15, 0
    %vm121 = vcmask 1041408
    %v123 = vsel %vm121, %v112, 0
    %125 = vmatprep.subr.mxu0 0.0
    %126 = vmatpush1.msra.mxu0 %v111
    %127 = vmatprep.subr.mxu0 0.0
    %128 = vmatpush1.msra.mxu0 %v123
    %129 = vmatprep.subr.mxu0 0.0
    %130 = vmatpush1.msra.mxu0 0.0
    %131 = vmatprep.subr.mxu0 0.0
    %132 = vmatpush1.msra.mxu0 0.0
    %133 = vmatprep.subr.mxu0 0.0
    %134 = vmatpush1.msra.mxu0 0.0
    %135 = vmatprep.subr.mxu0 0.0
    %136 = vmatpush1.msra.mxu0 0.0
    %137 = vmatprep.subr.mxu0 0.0
    %138 = vmatpush1.msra.mxu0 0.0
    %139 = vmatprep.subr.mxu0 0.0
    %140 = vmatpush1.msra.mxu0 0.0
    %141 = vmatprep.subr.mxu0 0.0
    %142 = vmatpush1.msra.mxu0 0.0
    %143 = vmatprep.subr.mxu0 0.0
    %144 = vmatpush1.msra.mxu0 0.0
    %145 = vmatprep.subr.mxu0 0.0
    %146 = vmatpush1.msra.mxu0 0.0
    %147 = vmatprep.subr.mxu0 0.0
    %148 = vmatpush1.msra.mxu0 0.0
    %149 = vmatprep.subr.mxu0 0.0
    %150 = vmatpush1.msra.mxu0 0.0
    %151 = vmatprep.subr.mxu0 0.0
    %152 = vmatpush1.msra.mxu0 0.0
    %153 = vmatprep.subr.mxu0 0.0
    %154 = vmatpush1.msra.mxu0 0.0
    %155 = vmatprep.subr.mxu0 0.0
    %156 = vmatpush1.msra.mxu0 0.0
    %157 = vmatprep.subr.mxu0 0.0
    %158 = vmatpush1.msra.mxu0 0.0
    %159 = vmatprep.subr.mxu0 0.0
    %160 = vmatpush1.msra.mxu0 0.0
    %161 = vmatprep.subr.mxu0 0.0
    %162 = vmatpush1.msra.mxu0 0.0
    %163 = vmatprep.subr.mxu0 0.0
    %164 = vmatpush1.msra.mxu0 0.0
    %165 = vmatprep.subr.mxu0 0.0
    %166 = vmatpush1.msra.mxu0 0.0
    %167 = vmatprep.subr.mxu0 0.0
    %168 = vmatpush1.msra.mxu0 0.0
    %169 = vmatprep.subr.mxu0 0.0
    %170 = vmatpush1.msra.mxu0 0.0
    %171 = vmatprep.subr.mxu0 0.0
    %172 = vmatpush1.msra.mxu0 0.0
    %173 = vmatprep.subr.mxu0 0.0
    %174 = vmatpush1.msra.mxu0 0.0
    %175 = vmatprep.subr.mxu0 0.0
    %176 = vmatpush1.msra.mxu0 0.0
    %177 = vmatprep.subr.mxu0 0.0
    %178 = vmatpush1.msra.mxu0 0.0
    %179 = vmatprep.subr.mxu0 0.0
    %180 = vmatpush1.msra.mxu0 0.0
    %181 = vmatprep.subr.mxu0 0.0
    %182 = vmatpush1.msra.mxu0 0.0
    %183 = vmatprep.subr.mxu0 0.0
    %184 = vmatpush1.msra.mxu0 0.0
    %185 = vmatprep.subr.mxu0 0.0
    %186 = vmatpush1.msra.mxu0 0.0
    %187 = vmatprep.subr.mxu0 0.0
    %188 = vmatpush1.msra.mxu0 0.0
    %189 = vmatprep.mubr.f32.mxu0 0.0
    %190 = vmatmul.mubr.f32.gmra.mrb[0].mxu0 %v119
    %v191 = vpop.f32.mrb[0].mxu0
    %v192 = vadd.f32 %v116, %v191
    %v193 = vpop.f32.mrb[0].mxu0
    %194 = vdwg.mxu0
    %v195 = vmax.f32 %v192, 0.0
    %197 = vset.pattern.permute.xlu0 5
    %198 = vperm.xlu0 %197, %v16
    %v199 = vpop.permute.xlu0 %198
    %vm201 = vcmask 39936
    %v202 = vsel %vm201, %v16, 0
    %vm204 = vcmask 1044480
    %v206 = vsel %vm204, %v195, 0
    %208 = vmatprep.subr.mxu0 0.0
    %209 = vmatpush1.msra.mxu0 %v206
    %210 = vmatprep.subr.mxu0 0.0
    %211 = vmatpush1.msra.mxu0 0.0
    %212 = vmatprep.subr.mxu0 0.0
    %213 = vmatpush1.msra.mxu0 0.0
    %214 = vmatprep.subr.mxu0 0.0
    %215 = vmatpush1.msra.mxu0 0.0
    %216 = vmatprep.subr.mxu0 0.0
    %217 = vmatpush1.msra.mxu0 0.0
    %218 = vmatprep.subr.mxu0 0.0
    %219 = vmatpush1.msra.mxu0 0.0
    %220 = vmatprep.subr.mxu0 0.0
    %221 = vmatpush1.msra.mxu0 0.0
    %222 = vmatprep.subr.mxu0 0.0
    %223 = vmatpush1.msra.mxu0 0.0
    %224 = vmatprep.subr.mxu0 0.0
    %225 = vmatpush1.msra.mxu0 0.0
    %226 = vmatprep.subr.mxu0 0.0
    %227 = vmatpush1.msra.mxu0 0.0
    %228 = vmatprep.subr.mxu0 0.0
    %229 = vmatpush1.msra.mxu0 0.0
    %230 = vmatprep.subr.mxu0 0.0
    %231 = vmatpush1.msra.mxu0 0.0
    %232 = vmatprep.subr.mxu0 0.0
    %233 = vmatpush1.msra.mxu0 0.0
    %234 = vmatprep.subr.mxu0 0.0
    %235 = vmatpush1.msra.mxu0 0.0
    %236 = vmatprep.subr.mxu0 0.0
    %237 = vmatpush1.msra.mxu0 0.0
    %238 = vmatprep.subr.mxu0 0.0
    %239 = vmatpush1.msra.mxu0 0.0
    %240 = vmatprep.subr.mxu0 0.0
    %241 = vmatpush1.msra.mxu0 0.0
    %242 = vmatprep.subr.mxu0 0.0
    %243 = vmatpush1.msra.mxu0 0.0
    %244 = vmatprep.subr.mxu0 0.0
    %245 = vmatpush1.msra.mxu0 0.0
    %246 = vmatprep.subr.mxu0 0.0
    %247 = vmatpush1.msra.mxu0 0.0
    %248 = vmatprep.subr.mxu0 0.0
    %249 = vmatpush1.msra.mxu0 0.0
    %250 = vmatprep.subr.mxu0 0.0
    %251 = vmatpush1.msra.mxu0 0.0
    %252 = vmatprep.subr.mxu0 0.0
    %253 = vmatpush1.msra.mxu0 0.0
    %254 = vmatprep.subr.mxu0 0.0
    %255 = vmatpush1.msra.mxu0 0.0
    %256 = vmatprep.subr.mxu0 0.0
    %257 = vmatpush1.msra.mxu0 0.0
    %258 = vmatprep.subr.mxu0 0.0
    %259 = vmatpush1.msra.mxu0 0.0
    %260 = vmatprep.subr.mxu0 0.0
    %261 = vmatpush1.msra.mxu0 0.0
    %262 = vmatprep.subr.mxu0 0.0
    %263 = vmatpush1.msra.mxu0 0.0
    %264 = vmatprep.subr.mxu0 0.0
    %265 = vmatpush1.msra.mxu0 0.0
    %266 = vmatprep.subr.mxu0 0.0
    %267 = vmatpush1.msra.mxu0 0.0
    %268 = vmatprep.subr.mxu0 0.0
    %269 = vmatpush1.msra.mxu0 0.0
    %270 = vmatprep.subr.mxu0 0.0
    %271 = vmatpush1.msra.mxu0 0.0
    %272 = vmatprep.mubr.f32.mxu0 0.0
    %273 = vmatmul.mubr.f32.gmra.mrb[0].mxu0 %v202
    %v274 = vpop.f32.mrb[0].mxu0
    %v275 = vadd.f32 %v199, %v274
    %v276 = vpop.f32.mrb[0].mxu0
    %277 = vdwg.mxu0
    %vm278 = vcmask 1043456
    %v279 = vsel %vm278, %v275, -inf
    %v280 = vrot.slane %v279, 4
    %v281 = vmax.f32 %v279, %v280
    %v282 = vrot.slane %v281, 2
    %v283 = vmax.f32 %v281, %v282
    %v284 = vrot.slane %v283, 1
    %v285 = vmax.f32 %v283, %v284
    %v286 = vsub.f32 %v275, %v285
    %v287 = vmul.f32 %v286, 1.442695
    %v288 = vpow.pop %v287
    %v289 = vsel %vm278, %v288, 0.0
    %v290 = vrot.slane %v289, 4
    %v291 = vadd.f32 %v289, %v290
    %v292 = vrot.slane %v291, 2
    %v293 = vadd.f32 %v291, %v292
    %v294 = vrot.slane %v293, 1
    %v295 = vadd.f32 %v293, %v294
    %v296 = vrcp.pop %v295
    %v297 = vmul.f32 %v288, %v296
    %298 = vst [vmem:[#allocation2] sm:$0xf] %v297
    // Predicated region
    $region10: #{linear_net_forward_fm.1} parent=1 // pred_check
      _
    $region11: #{linear_net_forward_fm.1} parent=1 // pred_check_branch
      %300 = sbr.rel (0) target = $region13
    $region12: #{linear_net_forward_fm.1} parent=1 // pred_region
      %s302 = ssub.s32 64, 64
      %303 = vsyncadd [#allocation3], %s302
      %s305 = sshll.u32 [#allocation2], 4
      %s306 = int_to_ptr.vmem [resolvable:$true] %s305
      %308 = dma.vmem_to_hbm [thread:$0]  %s306, 64, %s2, [#allocation3]
    $region13: #{linear_net_forward_fm.1} parent=1 // pred_fallthru
      _
    // Predicated region
    $region14: #{linear_net_forward_fm.1} parent=1 // pred_check
      _
    $region15: #{linear_net_forward_fm.1} parent=1 // pred_check_branch
      %310 = sbr.rel (0) target = $region17
    $region16: #{linear_net_forward_fm.1} parent=1 // pred_region
      %311 = dma.done [#allocation3], 64
    $region17: #{linear_net_forward_fm.1} parent=1 // pred_fallthru
      _
    %312 = vsyncpa [#allocation3], 1

</llo_original>
